<compile_context>
chip_gen: v7x
topology: tpu7x:2x2x1
jax: 0.10.0
libtpu: 0.0.40
codegen_flags: <defaults>
</compile_context>

<pallas_src>
import functools
import math

import jax
import jax.numpy as jnp
from jax.experimental import pallas as pl
from jax.experimental.pallas import tpu as pltpu


_VMEM_LIMIT = 48 * 1024 * 1024  # fits every generation (v7x physical = 64 MiB)


def _round_up(x, m):
    return (x + m - 1) // m * m


def _pick_tile(dim, pref, align):
    """Tile size: full (aligned) extent for small dims, `pref` otherwise."""
    if dim <= pref:
        return _round_up(dim, align)
    return pref  # pref is a multiple of align


def _pad_to(x, shape, value=0):
    pads = tuple((0, s - d) for d, s in zip(x.shape, shape))
    if any(p[1] for p in pads):
        return jnp.pad(x, pads, constant_values=value)
    return x


# ----------------------------------------------------------------------------
# Tiled matmul: grid (M//tm, N//tn, K//tk), f32 accumulator, bf16 operands
# ----------------------------------------------------------------------------
def _matmul_kernel(x_ref, w_ref, o_ref, acc_ref):
    @pl.when(pl.program_id(2) == 0)
    def _():
        acc_ref[...] = jnp.zeros_like(acc_ref)

    acc_ref[...] += jnp.dot(
        x_ref[...], w_ref[...], preferred_element_type=jnp.float32
    )

    @pl.when(pl.program_id(2) == pl.num_programs(2) - 1)
    def _():
        o_ref[...] = acc_ref[...].astype(o_ref.dtype)


def pallas_matmul(x, w, out_dtype=jnp.bfloat16, tm=256, tn=512, tk=512):
    """x: [M, K], w: [K, N] -> [M, N].  Operands cast to bf16, f32 accumulate."""
    M, K = x.shape
    K2, N = w.shape
    assert K == K2

    tm = _pick_tile(M, tm, 8)
    tn = _pick_tile(N, tn, 128)
    tk = _pick_tile(K, tk, 128)
    Mp, Np, Kp = _round_up(M, tm), _round_up(N, tn), _round_up(K, tk)

    xp = _pad_to(x.astype(jnp.bfloat16), (Mp, Kp))
    wp = _pad_to(w.astype(jnp.bfloat16), (Kp, Np))

    grid = (Mp // tm, Np // tn, Kp // tk)
    out = pl.pallas_call(
        _matmul_kernel,
        out_shape=jax.ShapeDtypeStruct((Mp, Np), out_dtype),
        grid_spec=pltpu.PrefetchScalarGridSpec(
            num_scalar_prefetch=0,
            grid=grid,
            in_specs=[
                pl.BlockSpec((tm, tk), lambda i, j, k: (i, k)),
                pl.BlockSpec((tk, tn), lambda i, j, k: (k, j)),
            ],
            out_specs=pl.BlockSpec((tm, tn), lambda i, j, k: (i, j)),
            scratch_shapes=[pltpu.VMEM((tm, tn), jnp.float32)],
        ),
        compiler_params=pltpu.CompilerParams(
            dimension_semantics=("parallel", "parallel", "arbitrary"),
            vmem_limit_bytes=_VMEM_LIMIT,
        ),
    )(xp, wp)
    if (Mp, Np) != (M, N):
        out = out[:M, :N]
    return out


# ----------------------------------------------------------------------------
# Flash-attention (packed sequences, causal + segment mask, online softmax)
# ----------------------------------------------------------------------------
def _flash_attn_kernel(segq_ref, segk_ref, q_ref, k_ref, v_ref, o_ref,
                       m_sc, l_sc, acc_sc, *, scale):
    qi = pl.program_id(1)
    ki = pl.program_id(2)

    @pl.when(ki == 0)
    def _():
        m_sc[...] = jnp.full_like(m_sc, -jnp.inf)
        l_sc[...] = jnp.zeros_like(l_sc)
        acc_sc[...] = jnp.zeros_like(acc_sc)

    q = q_ref[0]  # (tq, D) bf16
    k = k_ref[0]  # (tk, D) bf16
    v = v_ref[0]  # (tk, D) bf16

    # contract last dims directly (no k transpose through the XLU)
    s = jax.lax.dot_general(
        q, k, (((1,), (1,)), ((), ())), preferred_element_type=jnp.float32
    ) * scale                                              # (tq, tk) f32

    tq, tk = s.shape
    row = qi * tq + jax.lax.broadcasted_iota(jnp.int32, (tq, tk), 0)
    col = ki * tk + jax.lax.broadcasted_iota(jnp.int32, (tq, tk), 1)
    same_seq = segq_ref[...] == segk_ref[...]              # (tq,1)==(1,tk)
    mask = jnp.logical_and(same_seq, col <= row)
    s = jnp.where(mask, s, -1e30)

    m_prev = m_sc[...]
    m_new = jnp.maximum(m_prev, jnp.max(s, axis=-1, keepdims=True))
    alpha = jnp.exp(m_prev - m_new)
    p = jnp.exp(s - m_new)
    l_sc[...] = alpha * l_sc[...] + jnp.sum(p, axis=-1, keepdims=True)
    acc_sc[...] = alpha * acc_sc[...] + jax.lax.dot_general(
        p.astype(v.dtype), v, (((1,), (0,)), ((), ())),
        preferred_element_type=jnp.float32,
    )
    m_sc[...] = m_new

    @pl.when(ki == pl.num_programs(2) - 1)
    def _():
        inv_l = pl.reciprocal(l_sc[...], approx=True)
        o_ref[0] = (acc_sc[...] * inv_l).astype(o_ref.dtype)


def pallas_flash_attention(q, k, v, seg, block=256):
    """q,k,v: [H, T, D]; seg: [T] int32 segment ids -> [H, T, D]."""
    H, T, D = q.shape
    scale = 1.0 / math.sqrt(D)

    t = _pick_tile(T, block, 8)          # one tile size for q and kv blocks
    Tp = _round_up(T, t)

    qp = _pad_to(q.astype(jnp.bfloat16), (H, Tp, D))
    kp = _pad_to(k.astype(jnp.bfloat16), (H, Tp, D))
    vp = _pad_to(v.astype(jnp.bfloat16), (H, Tp, D))
    seg_p = _pad_to(seg.astype(jnp.int32), (Tp,), value=-1)
    seg_q = seg_p[:, None]               # [Tp, 1]
    seg_k = seg_p[None, :]               # [1, Tp]

    grid = (H, Tp // t, Tp // t)
    kernel = functools.partial(_flash_attn_kernel, scale=scale)
    out = pl.pallas_call(
        kernel,
        out_shape=jax.ShapeDtypeStruct((H, Tp, D), jnp.bfloat16),
        grid_spec=pltpu.PrefetchScalarGridSpec(
            num_scalar_prefetch=0,
            grid=grid,
            in_specs=[
                pl.BlockSpec((t, 1), lambda h, qi, ki: (qi, 0)),
                pl.BlockSpec((1, t), lambda h, qi, ki: (0, ki)),
                pl.BlockSpec((1, t, D), lambda h, qi, ki: (h, qi, 0)),
                pl.BlockSpec((1, t, D), lambda h, qi, ki: (h, ki, 0)),
                pl.BlockSpec((1, t, D), lambda h, qi, ki: (h, ki, 0)),
            ],
            out_specs=pl.BlockSpec((1, t, D), lambda h, qi, ki: (h, qi, 0)),
            scratch_shapes=[
                pltpu.VMEM((t, 1), jnp.float32),
                pltpu.VMEM((t, 1), jnp.float32),
                pltpu.VMEM((t, D), jnp.float32),
            ],
        ),
        compiler_params=pltpu.CompilerParams(
            dimension_semantics=("parallel", "parallel", "arbitrary"),
            vmem_limit_bytes=_VMEM_LIMIT,
        ),
    )(seg_q, seg_k, qp, kp, vp)
    if Tp != T:
        out = out[:, :T, :]
    return out


# ----------------------------------------------------------------------------
# Light-weight metadata containers (stand-ins for vLLM AttentionMetadata)
# ----------------------------------------------------------------------------
class PrefillMetadata:
    def __init__(self, seq_lens_tensor):
        self.seq_lens_tensor = seq_lens_tensor


class AttentionMetadata:
    def __init__(self, num_prefill_tokens, prefill_metadata, slot_mapping=None,
                 decode_metadata=None):
        self.num_prefill_tokens = num_prefill_tokens
        self.prefill_metadata = prefill_metadata
        self.slot_mapping = slot_mapping
        self.decode_metadata = decode_metadata


# ----------------------------------------------------------------------------
# MindIELlmWrapper (JAX / Pallas version)
# ----------------------------------------------------------------------------
class MindIELlmWrapper:
    def __init__(self, mindie_model_config, linear_method=None, lora_config=None):
        self.mindie_model_config = mindie_model_config
        self.rank = mindie_model_config['rank']
        self.local_rank = mindie_model_config['local_rank']
        self.npu_id = self.local_rank
        self.world_size = mindie_model_config['world_size']
        # model-runner style config (needed for the dummy KV cache shapes)
        self.num_kv_heads = mindie_model_config['num_kv_heads']
        self.head_size = mindie_model_config['head_size']
        self.num_layers = mindie_model_config['num_layers']
        self.vocab_size = mindie_model_config['vocab_size']
        self.max_position = mindie_model_config['max_position']
        self.hidden_size = self.num_kv_heads * self.head_size
        self.weight_dtype = jnp.bfloat16     # bf16 weights/activations on TPU
        self._params = None
        self.kv_caches = None

    # ----- load_weights: deterministic in-script init (no checkpoint) -------
    def load_weights(self, model_name_or_path="synthetic", cache_dir=None,
                     load_format='auto', revision=None):
        if load_format not in ['auto', 'safetensors', 'pt']:
            raise ValueError('load-format support [safetensors, pt]')
        key = jax.random.PRNGKey(0)
        k1, k2, k3, k4, k5 = jax.random.split(key, 5)
        H = self.hidden_size
        dt = self.weight_dtype
        self._params = {
            'embed': (jax.random.normal(k1, (self.vocab_size, H), jnp.float32) * 0.02).astype(dt),
            'pos_embed': (jax.random.normal(k2, (self.max_position, H), jnp.float32) * 0.02).astype(dt),
            'w_qkv': (jax.random.normal(k3, (H, 3 * H), jnp.float32) * (1.0 / math.sqrt(H))).astype(dt),
            'w_o': (jax.random.normal(k4, (H, H), jnp.float32) * (1.0 / math.sqrt(H))).astype(dt),
            'w_lm_head': (jax.random.normal(k5, (H, self.vocab_size), jnp.float32) * (1.0 / math.sqrt(H))).astype(dt),
        }

    # ----- the synthetic "mindie model" forward (hot path in Pallas) --------
    def _forward_tensor(self, input_ids, positions, is_prompt, kv_caches,
                        block_tables, slots, input_lengths, max_seq_len,
                        lm_head_indices):
        p = self._params
        T = input_ids.shape[0]
        H, D = self.num_kv_heads, self.head_size

        # embedding gathers (glue), bf16
        hidden = p['embed'][input_ids] + p['pos_embed'][positions]   # [T, hidden]

        # fused QKV projection (tiled Pallas matmul, bf16 out)
        qkv = pallas_matmul(hidden, p['w_qkv'])                      # [T, 3*hidden]
        q, k, v = jnp.split(qkv, 3, axis=-1)
        q = q.reshape(T, H, D)
        k = k.reshape(T, H, D)
        v = v.reshape(T, H, D)

        # write K/V into the paged cache at `slots` (write-only scatter; no
        # read-back gather — q/k/v feed attention directly below).
        # TODO(synk): in production alias/donate the cache buffers (or use a
        # Pallas scatter with input_output_aliases) to avoid the functional copy.
        k_cache, v_cache = kv_caches[0]
        kc = k_cache.reshape(-1, H, D).at[slots].set(k.astype(k_cache.dtype))
        vc = v_cache.reshape(-1, H, D).at[slots].set(v.astype(v_cache.dtype))
        self.kv_caches = [(kc.reshape(k_cache.shape), vc.reshape(v_cache.shape))]

        # causal/segmented flash attention (Pallas), per head
        batch = input_lengths.shape[0]
        seg = jnp.repeat(jnp.arange(batch, dtype=jnp.int32),
                         input_lengths, total_repeat_length=T)        # [T]
        q_t = jnp.transpose(q, (1, 0, 2))                             # [H, T, D]
        k_t = jnp.transpose(k, (1, 0, 2))
        v_t = jnp.transpose(v, (1, 0, 2))
        attn_out = pallas_flash_attention(q_t, k_t, v_t, seg)         # [H, T, D]
        attn_out = jnp.transpose(attn_out, (1, 0, 2)).reshape(T, H * D)

        # output projection + residual (Pallas matmul, bf16)
        hidden = hidden + pallas_matmul(attn_out, p['w_o'])           # [T, hidden]

        # LM head only at lm_head_indices (last token of each prefill seq);
        # M is padded to a multiple of 8 inside pallas_matmul; logits in f32.
        if lm_head_indices is not None:
            hidden = hidden[lm_head_indices]                          # [B, hidden]
        logits = pallas_matmul(hidden, p['w_lm_head'],
                               out_dtype=jnp.float32)                 # [B, vocab]
        return logits

    # ----- forward: faithful to the PyTorch wrapper logic --------------------
    def forward(self, input_ids, positions, kv_caches, attn_metadata):
        is_prompt = attn_metadata.num_prefill_tokens > 0
        if kv_caches[0][0] is None:
            kv_caches, block_tables, slots = self.create_dummy_kv_cache(
                attn_metadata, input_ids)
        else:
            if is_prompt:
                block_tables = jnp.array([0], dtype=jnp.int32)
            else:
                block_tables = attn_metadata.decode_metadata.block_tables
            slots = attn_metadata.slot_mapping

        if is_prompt:
            seq_lens = attn_metadata.prefill_metadata.seq_lens_tensor
            input_lengths = seq_lens.astype(jnp.int32)
            max_seq_len = int(jnp.max(seq_lens))
            # (int64 in torch; int32 here since x64 is disabled by default)
            lm_head_indices = (jnp.cumsum(seq_lens, axis=-1) - 1).astype(jnp.int32)
        else:
            input_lengths = attn_metadata.decode_metadata.seq_lens_tensor
            max_seq_len = attn_metadata.decode_metadata.max_seq_len
            lm_head_indices = None

        logits = self._forward_tensor(input_ids, positions, is_prompt,
                                      kv_caches, block_tables, slots,
                                      input_lengths, max_seq_len,
                                      lm_head_indices)
        return logits

    def compute_logits(self, hidden_states, sampling_metadata=None):
        return hidden_states

    # TODO(synk): `sample` relies on AscendSampler (external); not translated.

    def create_dummy_kv_cache(self, attn_metadata, input_ids):
        dummy_block_num = 1
        dummy_block_size = 128
        kv_cache = [
            (jnp.zeros((dummy_block_num, dummy_block_size,
                        self.num_kv_heads, self.head_size), self.weight_dtype),
             jnp.zeros((dummy_block_num, dummy_block_size,
                        self.num_kv_heads, self.head_size), self.weight_dtype))
            for _ in range(self.num_layers)
        ]
        seq_lens = attn_metadata.prefill_metadata.seq_lens_tensor
        max_s = int(jnp.max(seq_lens))
        max_need_block = math.ceil(max_s / dummy_block_size)
        batch_size = int(seq_lens.shape[0])
        block_tables = jnp.zeros((batch_size, max_need_block), dtype=jnp.int32)
        slot = list(range(dummy_block_size))
        slots = []
        warm_up_len = int(input_ids.shape[0])
        while warm_up_len > 0:
            if warm_up_len > dummy_block_size:
                slots.extend(slot)
                warm_up_len -= dummy_block_size
            else:
                slots.extend(slot[:warm_up_len])
                warm_up_len = 0
        slots = jnp.array(slots, dtype=jnp.int32)
        return kv_cache, block_tables, slots


# ----------------------------------------------------------------------------
if __name__ == "__main__":
    # small synthetic prefill: batch=2 sequences of lengths [5, 3] -> T=8 tokens
    config = dict(rank=0, local_rank=0, world_size=1,
                  num_kv_heads=2, head_size=16, num_layers=1,
                  vocab_size=256, max_position=64)
    wrapper = MindIELlmWrapper(config)
    wrapper.load_weights()

    key = jax.random.PRNGKey(0)
    seq_lens = jnp.array([5, 3], dtype=jnp.int32)
    T = int(jnp.sum(seq_lens))
    input_ids = jax.random.randint(key, (T,), 0, config['vocab_size'], dtype=jnp.int32)
    positions = jnp.concatenate([jnp.arange(5, dtype=jnp.int32),
                                 jnp.arange(3, dtype=jnp.int32)])

    attn_metadata = AttentionMetadata(
        num_prefill_tokens=T,
        prefill_metadata=PrefillMetadata(seq_lens_tensor=seq_lens),
        slot_mapping=jnp.arange(T, dtype=jnp.int32),
        decode_metadata=None,
    )
    kv_caches = [(None, None)]  # triggers create_dummy_kv_cache (warm-up path)

    logits = wrapper.forward(input_ids, positions, kv_caches, attn_metadata)
    jax.block_until_ready(logits)
    assert logits.shape == (2, config['vocab_size'])
    assert logits.dtype == jnp.float32
    assert bool(jnp.all(jnp.isfinite(logits)))
    print("KERNEL_OK")
</pallas_src>

<mosaic_0001>
module attributes {stable_mosaic.version = 11 : i64} {
  func.func @_matmul_kernel(%arg0: i32, %arg1: i32, %arg2: i32, %arg3: memref<8x128xbf16, #tpu.memory_space<vmem>>, %arg4: memref<128x128xbf16, #tpu.memory_space<vmem>>, %arg5: memref<8x128xbf16, #tpu.memory_space<vmem>>, %arg6: memref<8x128xf32, #tpu.memory_space<vmem>>) attributes {dimension_semantics = [#tpu.dimension_semantics<parallel>, #tpu.dimension_semantics<parallel>, #tpu.dimension_semantics<arbitrary>], iteration_bounds = array<i64: 1, 1, 1>, scalar_prefetch = 0 : i64, scratch_operands = 1 : i64, tpu.core_type = #tpu.core_type<tc>, window_params = [{transform_indices = @transform_0, window_bounds = array<i64: 8, 128>}, {transform_indices = @transform_1, window_bounds = array<i64: 128, 128>}, {transform_indices = @transform_2, window_bounds = array<i64: 8, 128>}]} {
    %c0_i32 = arith.constant 0 : i32
    %0 = arith.cmpi eq, %arg2, %c0_i32 : i32
    %1 = arith.extui %0 : i1 to i32
    %c0_i32_0 = arith.constant 0 : i32
    %2 = arith.cmpi ne, %1, %c0_i32_0 : i32
    scf.if %2 {
      %cst_10 = arith.constant 0.000000e+00 : f32
      %12 = vector.broadcast %cst_10 : f32 to vector<8x128xf32>
      %c0_11 = arith.constant 0 : index
      %c0_12 = arith.constant 0 : index
      %13 = vector.load %arg6[%c0_11, %c0_12] : memref<8x128xf32, #tpu.memory_space<vmem>>, vector<8x128xf32>
      tpu.vector_store %arg6[%c0_11, %c0_12], %12 {strides = array<i32>} : memref<8x128xf32, #tpu.memory_space<vmem>>, vector<8x128xf32>,
    } else {
    }
    %c0 = arith.constant 0 : index
    %c0_1 = arith.constant 0 : index
    %3 = vector.load %arg6[%c0, %c0_1] : memref<8x128xf32, #tpu.memory_space<vmem>>, vector<8x128xf32>
    %c0_2 = arith.constant 0 : index
    %c0_3 = arith.constant 0 : index
    %4 = vector.load %arg3[%c0_2, %c0_3] : memref<8x128xbf16, #tpu.memory_space<vmem>>, vector<8x128xbf16>
    %c0_4 = arith.constant 0 : index
    %c0_5 = arith.constant 0 : index
    %5 = vector.load %arg4[%c0_4, %c0_5] : memref<128x128xbf16, #tpu.memory_space<vmem>>, vector<128x128xbf16>
    %cst = arith.constant dense<0.000000e+00> : vector<8x128xf32>
    %6 = tpu.matmul %4, %5, %cst {dimension_numbers = #tpu.dot_dimension_numbers<[1], [0], [0], [1], [0, 0, 1, 1], [], []>} : vector<8x128xbf16>, vector<128x128xbf16>, vector<8x128xf32> -> vector<8x128xf32>
    %7 = arith.addf %3, %6 : vector<8x128xf32>
    %c0_6 = arith.constant 0 : index
    %c0_7 = arith.constant 0 : index
    %8 = vector.load %arg6[%c0_6, %c0_7] : memref<8x128xf32, #tpu.memory_space<vmem>>, vector<8x128xf32>
    tpu.vector_store %arg6[%c0_6, %c0_7], %7 {strides = array<i32>} : memref<8x128xf32, #tpu.memory_space<vmem>>, vector<8x128xf32>,
    %c0_i32_8 = arith.constant 0 : i32
    %9 = arith.cmpi eq, %arg2, %c0_i32_8 : i32
    %10 = arith.extui %9 : i1 to i32
    %c0_i32_9 = arith.constant 0 : i32
    %11 = arith.cmpi ne, %10, %c0_i32_9 : i32
    scf.if %11 {
      %c0_10 = arith.constant 0 : index
      %c0_11 = arith.constant 0 : index
      %12 = vector.load %arg6[%c0_10, %c0_11] : memref<8x128xf32, #tpu.memory_space<vmem>>, vector<8x128xf32>
      %13 = arith.truncf %12 : vector<8x128xf32> to vector<8x128xbf16>
      %c0_12 = arith.constant 0 : index
      %c0_13 = arith.constant 0 : index
      %14 = vector.load %arg5[%c0_12, %c0_13] : memref<8x128xbf16, #tpu.memory_space<vmem>>, vector<8x128xbf16>
      tpu.vector_store %arg5[%c0_12, %c0_13], %13 {strides = array<i32>} : memref<8x128xbf16, #tpu.memory_space<vmem>>, vector<8x128xbf16>,
    } else {
    }
    return
  }
  func.func @transform_0(%arg0: i32, %arg1: i32, %arg2: i32) -> (i32, i32) {
    %c0_i32 = arith.constant 0 : i32
    return %arg0, %arg2 : i32, i32
  }
  func.func @transform_1(%arg0: i32, %arg1: i32, %arg2: i32) -> (i32, i32) {
    %c0_i32 = arith.constant 0 : i32
    return %arg2, %arg1 : i32, i32
  }
  func.func @transform_2(%arg0: i32, %arg1: i32, %arg2: i32) -> (i32, i32) {
    %c0_i32 = arith.constant 0 : i32
    return %arg0, %arg1 : i32, i32
  }
}

</mosaic_0001>

<llo_original>
// kernel: tpu_custom_call.1
$region0: #{tpu_custom_call.1}
  #allocation0 [shape = 'u32[]', space=smem, size = 0x4, offset = 0x4, fixed_abs, tag = 'smem constant byte address 0x4 - core index']
  #allocation1 [shape = 'u32[144,128]{1,0:T(1,128)}', space=vmem, size = 0x12000, scoped, tag = 'internal scratch']
  #allocation2 [shape = 'f32[8,128]{1,0:T(8,128)}', space=vmem, size = 0x1000, scoped, tag = 'scratch operand']
  %s0 = inlined_call_operand.hbm [shape: bf16[8,128], index: 0, kind: input, shape index: {}]
  %s1 = inlined_call_operand.hbm [shape: bf16[128,128], index: 1, kind: input, shape index: {}]
  %s2 = inlined_call_operand.hbm [shape: bf16[8,128], index: 2, kind: output, shape index: {}]
  %s3 = sld [smem:[#allocation0]]
  $region34: #{tpu_custom_call.1} parent=0
    _
  %s5 = ssub.s32 1, %s3
  %s6 = scalar_select 0, %s5, %s3
  $region1: #{tpu_custom_call.1} parent=0
    #allocation3 [shape = 'u8[2048]{0}', space=vmem, size = 0x800, scoped, tag = 'input window, operand 0, single buffered']
    #allocation4 [shape = 's32[1]{0}', space=sflag, size = 0x4, scoped, tag = 'scoped memory for tpu_custom_call.1']
    #allocation5 [shape = 's32[1]{0}', space=sflag, size = 0x4, scoped, tag = 'scoped memory for tpu_custom_call.1']
    #allocation6 [shape = 'u8[32768]{0}', space=vmem, size = 0x8000, scoped, tag = 'input window, operand 1, single buffered']
    #allocation7 [shape = 's32[1]{0}', space=sflag, size = 0x4, scoped, tag = 'scoped memory for tpu_custom_call.1']
    #allocation8 [shape = 'u8[2048]{0}', space=vmem, size = 0x800, scoped, tag = 'output window, operand 0, single buffered']
    %7 = vsyncpa [#allocation4], 0
    %8 = vsyncpa [#allocation7], 0
    %9 = vsyncpa [#allocation5], 0
    // Predicated region
    $region2: #{tpu_custom_call.1} parent=1 // pred_check
      _
    $region3: #{tpu_custom_call.1} parent=1 // pred_check_branch
      %11 = sbr.rel (0) target = $region5
    $region4: #{tpu_custom_call.1} parent=1 // pred_region
      %s13 = ssub.s32 64, 64
      %14 = vsyncadd [#allocation4], %s13
      %s16 = sshll.u32 [#allocation3], 4
      %s17 = int_to_ptr.vmem [resolvable:$true] %s16
      %19 = dma.hbm_to_vmem [thread:$0]  %s0, 64, %s17, [#allocation4]
    $region5: #{tpu_custom_call.1} parent=1 // pred_fallthru
      _
    // Predicated region
    $region6: #{tpu_custom_call.1} parent=1 // pred_check
      _
    $region7: #{tpu_custom_call.1} parent=1 // pred_check_branch
      %21 = sbr.rel (0) target = $region9
    $region8: #{tpu_custom_call.1} parent=1 // pred_region
      %s23 = ssub.s32 1024, 1024
      %24 = vsyncadd [#allocation7], %s23
      %s25 = sshll.u32 [#allocation6], 4
      %s26 = int_to_ptr.vmem [resolvable:$true] %s25
      %31 = dma.hbm_to_vmem [thread:$0]  %s1, 1024, %s26, [#allocation7], 64, 64, 4
    $region9: #{tpu_custom_call.1} parent=1 // pred_fallthru
      _
    // Predicated region
    $region10: #{tpu_custom_call.1} parent=1 // pred_check
      _
    $region11: #{tpu_custom_call.1} parent=1 // pred_check_branch
      %33 = sbr.rel (0) target = $region13
    $region12: #{tpu_custom_call.1} parent=1 // pred_region
      %34 = dma.done [#allocation4], 64
    $region13: #{tpu_custom_call.1} parent=1 // pred_fallthru
      _
    // Predicated region
    $region14: #{tpu_custom_call.1} parent=1 // pred_check
      _
    $region15: #{tpu_custom_call.1} parent=1 // pred_check_branch
      %36 = sbr.rel (0) target = $region17
    $region16: #{tpu_custom_call.1} parent=1 // pred_region
      %37 = dma.done [#allocation7], 1024
    $region17: #{tpu_custom_call.1} parent=1 // pred_fallthru
      _
    %p39 = scmp.eq.s32.totalorder 0, 0
    // Predicated region
    $region18: #{tpu_custom_call.1} parent=1 // pred_check
      %p40 = pneg %p39
    $region19: #{tpu_custom_call.1} parent=1 // pred_check_branch
      %42 = sbr.rel (%p40) target = $region21
    $region20: #{tpu_custom_call.1} parent=1 // pred_region
      %43 = vst [vmem:[#allocation2] sm:$0xff] 0.0
    $region21: #{tpu_custom_call.1} parent=1 // pred_fallthru
      _
    %v44 = vld [vmem:[#allocation2] sm:$0xff]
    %v45 = vld [vmem:[#allocation3] sm:$0xf]
    %v46 = vld [vmem:[#allocation6] sm:$0xf]
    %v47 = vld [vmem:[#allocation6 + $0x4] sm:$0xf]
    %v48 = vld [vmem:[#allocation6 + $0x8] sm:$0xf]
    %v49 = vld [vmem:[#allocation6 + $0xc] sm:$0xf]
    %v50 = vld [vmem:[#allocation6 + $0x10] sm:$0xf]
    %v51 = vld [vmem:[#allocation6 + $0x14] sm:$0xf]
    %v52 = vld [vmem:[#allocation6 + $0x18] sm:$0xf]
    %v53 = vld [vmem:[#allocation6 + $0x1c] sm:$0xf]
    %v54 = vld [vmem:[#allocation6 + $0x20] sm:$0xf]
    %v55 = vld [vmem:[#allocation6 + $0x24] sm:$0xf]
    %v56 = vld [vmem:[#allocation6 + $0x28] sm:$0xf]
    %v57 = vld [vmem:[#allocation6 + $0x2c] sm:$0xf]
    %v58 = vld [vmem:[#allocation6 + $0x30] sm:$0xf]
    %v59 = vld [vmem:[#allocation6 + $0x34] sm:$0xf]
    %v60 = vld [vmem:[#allocation6 + $0x38] sm:$0xf]
    %v61 = vld [vmem:[#allocation6 + $0x3c] sm:$0xf]
    %v78 = vunpack.c.l.b16 %v46
    %v79 = vunpack.c.l.b16 %v47
    %v80 = vunpack.c.l.b16 %v48
    %v81 = vunpack.c.l.b16 %v49
    %v82 = vunpack.c.l.b16 %v50
    %v83 = vunpack.c.l.b16 %v51
    %v84 = vunpack.c.l.b16 %v52
    %v85 = vunpack.c.l.b16 %v53
    %v86 = vunpack.c.l.b16 %v54
    %v87 = vunpack.c.l.b16 %v55
    %v88 = vunpack.c.l.b16 %v56
    %v89 = vunpack.c.l.b16 %v57
    %v90 = vunpack.c.l.b16 %v58
    %v91 = vunpack.c.l.b16 %v59
    %v92 = vunpack.c.l.b16 %v60
    %v93 = vunpack.c.l.b16 %v61
    %v94 = vpack.c.b16 %v79, %v78
    %v95 = vpack.c.b16 %v81, %v80
    %v96 = vpack.c.b16 %v83, %v82
    %v97 = vpack.c.b16 %v85, %v84
    %v98 = vpack.c.b16 %v87, %v86
    %v99 = vpack.c.b16 %v89, %v88
    %v100 = vpack.c.b16 %v91, %v90
    %v101 = vpack.c.b16 %v93, %v92
    %110 = vmatprep.subr.bf16.mxu0 0
    %111 = vmatpush1.bf16.msra.mxu0 %v94
    %112 = vmatprep.subr.bf16.mxu0 0
    %113 = vmatpush1.bf16.msra.mxu0 %v95
    %114 = vmatprep.subr.bf16.mxu0 0
    %115 = vmatpush1.bf16.msra.mxu0 %v96
    %116 = vmatprep.subr.bf16.mxu0 0
    %117 = vmatpush1.bf16.msra.mxu0 %v97
    %118 = vmatprep.subr.bf16.mxu0 0
    %119 = vmatpush1.bf16.msra.mxu0 %v98
    %120 = vmatprep.subr.bf16.mxu0 0
    %121 = vmatpush1.bf16.msra.mxu0 %v99
    %122 = vmatprep.subr.bf16.mxu0 0
    %123 = vmatpush1.bf16.msra.mxu0 %v100
    %124 = vmatprep.subr.bf16.mxu0 0
    %125 = vmatpush1.bf16.msra.mxu0 %v101
    %126 = vmatprep.subr.bf16.mxu0 0
    %127 = vmatpush1.bf16.msra.mxu0 0
    %128 = vmatprep.subr.bf16.mxu0 0
    %129 = vmatpush1.bf16.msra.mxu0 0
    %130 = vmatprep.subr.bf16.mxu0 0
    %131 = vmatpush1.bf16.msra.mxu0 0
    %132 = vmatprep.subr.bf16.mxu0 0
    %133 = vmatpush1.bf16.msra.mxu0 0
    %134 = vmatprep.subr.bf16.mxu0 0
    %135 = vmatpush1.bf16.msra.mxu0 0
    %136 = vmatprep.subr.bf16.mxu0 0
    %137 = vmatpush1.bf16.msra.mxu0 0
    %138 = vmatprep.subr.bf16.mxu0 0
    %139 = vmatpush1.bf16.msra.mxu0 0
    %140 = vmatprep.subr.bf16.mxu0 0
    %141 = vmatpush1.bf16.msra.mxu0 0
    %142 = vmatprep.mubr.bf16.mxu0 0
    %143 = vmatmul.mubr.bf16.gmra.mrb[0].mxu0 %v45
    %v144 = vpop.f32.mrb[0].mxu0
    %v145 = vadd.f32 0.0, %v144
    %v146 = vpop.f32.mrb[0].mxu0
    %v147 = vpop.f32.mrb[0].mxu0
    %v148 = vpop.f32.mrb[0].mxu0
    %149 = vdwg.mxu0
    %v150 = vadd.f32 %v44, %v145
    %151 = vst [vmem:[#allocation2] sm:$0xff] %v150
    // Predicated region
    $region22: #{tpu_custom_call.1} parent=1 // pred_check
      %p152 = pneg %p39
    $region23: #{tpu_custom_call.1} parent=1 // pred_check_branch
      %154 = sbr.rel (%p152) target = $region25
    $region24: #{tpu_custom_call.1} parent=1 // pred_region
      %v155 = vld [vmem:[#allocation2] sm:$0xff]
      %v156 = vpack.c.bf16 %v155, %v155
      %157 = vst [vmem:[#allocation8] sm:$0xf] %v156
    $region25: #{tpu_custom_call.1} parent=1 // pred_fallthru
      _
    // Predicated region
    $region26: #{tpu_custom_call.1} parent=1 // pred_check
      _
    $region27: #{tpu_custom_call.1} parent=1 // pred_check_branch
      %159 = sbr.rel (0) target = $region29
    $region28: #{tpu_custom_call.1} parent=1 // pred_region
      %s161 = ssub.s32 64, 64
      %162 = vsyncadd [#allocation5], %s161
      %s164 = sshll.u32 [#allocation8], 4
      %s165 = int_to_ptr.vmem [resolvable:$true] %s164
      %167 = dma.vmem_to_hbm [thread:$0]  %s165, 64, %s2, [#allocation5]
    $region29: #{tpu_custom_call.1} parent=1 // pred_fallthru
      _
    // Predicated region
    $region30: #{tpu_custom_call.1} parent=1 // pred_check
      _
    $region31: #{tpu_custom_call.1} parent=1 // pred_check_branch
      %169 = sbr.rel (0) target = $region33
    $region32: #{tpu_custom_call.1} parent=1 // pred_region
      %170 = dma.done [#allocation5], 64
    $region33: #{tpu_custom_call.1} parent=1 // pred_fallthru
      _
    %171 = vsyncpa [#allocation4], 1
    %172 = vsyncpa [#allocation7], 1
    %173 = vsyncpa [#allocation5], 1

</llo_original>
